<compile_context>
chip_gen: v5e
topology: v5e:2x2
jax: 0.10.0
libtpu: 0.0.40
codegen_flags: <defaults>
</compile_context>

<pallas_src>
import jax
import jax.numpy as jnp
from jax.experimental import pallas as pl
from jax.experimental.pallas import tpu as pltpu


# ----------------------------------------------------------------------------
# Kernel: one MXU dot + bias add per batch tile, natural (row-major) layout.
#   w_ref : (4g, 3g)      block-diagonal folded weight, VMEM-resident
#   b_ref : (1, 3g)       lane-tiled folded bias (f32), VMEM-resident
#   x_ref : (TR, 4g)      x tile -- g samples per row, lane-dense
#   o_ref : (TR, 3g)      out tile -- lane-dense stores (full-array lane dim)
# ----------------------------------------------------------------------------
def _affine_kernel(w_ref, b_ref, x_ref, o_ref):
    acc = jnp.dot(x_ref[...], w_ref[...],
                  preferred_element_type=jnp.float32)           # (TR, 3g) f32
    o_ref[...] = (acc + b_ref[...]).astype(o_ref.dtype)


def _fold_params(w1, b1, w2, b2):
    """Exact algebraic fold of fc2(fc(x)) into a single affine map."""
    w = w1 @ w2                    # (4, 3)
    b = b1 @ w2 + b2               # (1, 3)
    return w, b


def mlp_forward_pallas(x, w1, b1, w2, b2, *, group=64, tile_b=262144):
    """Net.forward via a single lane-dense, batch-tiled Pallas kernel.

    group : samples packed per 2-D row (4*group input lanes / 3*group output
            lanes).  64 fills the 256-deep MXU on v6e/v7x; 32 suits v5e.
    tile_b: samples per grid step (must be a multiple of 8*group when the
            batch is larger than one tile).
    """
    B, K = x.shape                                   # K = 4
    w, b = _fold_params(w1, b1, w2, b2)
    N = w.shape[1]                                   # 3
    out_dtype = x.dtype
    g = int(group)

    # Pad the batch to a multiple of the lane group.  Free when B % g == 0
    # (the common large-batch case); otherwise a single small pad copy.
    B_pad = ((B + g - 1) // g) * g
    if B_pad != B:
        x = jnp.pad(x, ((0, B_pad - B), (0, 0)))
    R = B_pad // g

    # Layout-free views: contiguous dim-merge reshapes, no HBM transpose.
    x2 = x.reshape(R, K * g)                         # (R, 4g)

    # Block-diagonal folded weight (g copies of the (4,3) block) + tiled bias.
    # Weight streams at x's dtype; bias stays f32 so the add path is f32.
    w_bd = jnp.kron(jnp.eye(g, dtype=jnp.float32), w).astype(x.dtype)  # (4g, 3g)
    b_t = jnp.tile(b.astype(jnp.float32), (1, g))                      # (1, 3g)

    # Row tile (second-to-last dim): multiple of 8 or the full extent.
    assert tile_b % g == 0, "tile_b must be a multiple of group"
    tr = tile_b // g
    if tr >= R:
        tr = R                                       # single block: full extent OK
    else:
        assert tr % 8 == 0, "tile_b must be a multiple of 8*group"
    grid = (pl.cdiv(R, tr),)                         # partial last tile OK

    itemsize = jnp.dtype(x.dtype).itemsize
    cost = pl.CostEstimate(
        flops=2 * R * (K * g) * (N * g),
        transcendentals=0,
        bytes_accessed=(B_pad * (K + N)) * itemsize + (K * g) * (N * g) * itemsize,
    )

    out2 = pl.pallas_call(
        _affine_kernel,
        out_shape=jax.ShapeDtypeStruct((R, N * g), out_dtype),
        grid=grid,
        in_specs=[
            pl.BlockSpec((K * g, N * g), lambda i: (0, 0)),  # weight: resident
            pl.BlockSpec((1, N * g), lambda i: (0, 0)),      # bias:   resident
            pl.BlockSpec((tr, K * g), lambda i: (i, 0)),     # x batch tile
        ],
        out_specs=pl.BlockSpec((tr, N * g), lambda i: (i, 0)),
        compiler_params=pltpu.CompilerParams(
            # Advisory only on single-TC chips; a real 2-TC split on v7x would
            # use pltpu.CORE_PARALLEL / pl.core_map (kept portable here).
            dimension_semantics=("parallel",),
            # ~14 MiB live at the default tile (see header); 40 MiB leaves
            # ample headroom on v5e/v6e (128 MiB) and v7x (64 MiB physical).
            vmem_limit_bytes=40 * 1024 * 1024,
        ),
        cost_estimate=cost,
    )(w_bd, b_t, x2)

    out = out2.reshape(B_pad, N)                     # free dim-split reshape
    if B_pad != B:
        out = out[:B]
    return out


def mlp_forward(x, w1, b1, w2, b2, *, group=64, tile_b=262144,
                min_pallas_batch=4096):
    """Dispatcher: for small batches the fixed pallas_call cost dwarfs the
    work, so use the fused XLA affine (single read of x, single write of out).
    For large batches the Pallas path streams at the same useful traffic with
    explicit tiling control."""
    if x.shape[0] < min_pallas_batch:
        w, b = _fold_params(w1, b1, w2, b2)
        return (x @ w + b).astype(x.dtype)
    return mlp_forward_pallas(x, w1, b1, w2, b2, group=group, tile_b=tile_b)


def init_params(key):
    """Deterministic init mirroring nn.Linear defaults:
       U(-1/sqrt(fan_in), 1/sqrt(fan_in)) for both weight and bias.
       Weights stored as (in, out) == W.T relative to PyTorch's (out, in)."""
    k1, k2, k3, k4 = jax.random.split(key, 4)

    in1, out1 = 4, 32
    bound1 = 1.0 / jnp.sqrt(in1)
    w1 = jax.random.uniform(k1, (in1, out1), jnp.float32, -bound1, bound1)
    b1 = jax.random.uniform(k2, (1, out1), jnp.float32, -bound1, bound1)

    in2, out2 = 32, 3
    bound2 = 1.0 / jnp.sqrt(in2)
    w2 = jax.random.uniform(k3, (in2, out2), jnp.float32, -bound2, bound2)
    b2 = jax.random.uniform(k4, (1, out2), jnp.float32, -bound2, bound2)

    return w1, b1, w2, b2


def _reference(x, w1, b1, w2, b2):
    # Plain-JAX reference: same math as the (unfolded) PyTorch forward.
    return (x @ w1 + b1) @ w2 + b2


if __name__ == "__main__":
    key = jax.random.PRNGKey(0)
    k_params, k_x1, k_x2, k_x3 = jax.random.split(key, 4)
    w1, b1, w2, b2 = init_params(k_params)

    # --- Case 1: tiny batch (B=8) -> pad to one group, single grid step -----
    B1 = 8
    x1 = jax.random.normal(k_x1, (B1, 4), jnp.float32)
    out1 = jax.block_until_ready(mlp_forward_pallas(x1, w1, b1, w2, b2))
    ref1 = _reference(x1, w1, b1, w2, b2)
    assert out1.shape == (B1, 3)
    assert jnp.allclose(out1, ref1, atol=1e-5, rtol=1e-5)

    # --- Case 2: B not a multiple of the group AND larger than the tile -----
    #     (pad path + multiple grid steps + partial/masked last row tile)
    B2 = 4421
    x2 = jax.random.normal(k_x2, (B2, 4), jnp.float32)
    out2 = jax.block_until_ready(
        mlp_forward_pallas(x2, w1, b1, w2, b2, group=64, tile_b=1024))
    ref2 = _reference(x2, w1, b1, w2, b2)
    assert out2.shape == (B2, 3)
    assert jnp.allclose(out2, ref2, atol=1e-5, rtol=1e-5)

    # --- Case 3: exact multi-tile path (no padding, no partial tiles) -------
    B3 = 8192
    x3 = jax.random.normal(k_x3, (B3, 4), jnp.float32)
    out3 = jax.block_until_ready(
        mlp_forward_pallas(x3, w1, b1, w2, b2, group=64, tile_b=2048))
    ref3 = _reference(x3, w1, b1, w2, b2)
    assert out3.shape == (B3, 3)
    assert jnp.allclose(out3, ref3, atol=1e-5, rtol=1e-5)

    # --- Case 4: dispatcher fast-path for small batches (no Pallas) ---------
    out4 = jax.block_until_ready(mlp_forward(x1, w1, b1, w2, b2))
    assert jnp.allclose(out4, ref1, atol=1e-5, rtol=1e-5)

    # --- Case 5: dispatcher Pallas path for a large batch -------------------
    out5 = jax.block_until_ready(mlp_forward(x3, w1, b1, w2, b2))
    assert jnp.allclose(out5, ref3, atol=1e-5, rtol=1e-5)

    print("KERNEL_OK")
</pallas_src>

<mosaic_0001>
module attributes {stable_mosaic.version = 11 : i64} {
  func.func @_affine_kernel(%arg0: i32, %arg1: memref<256x192xf32, #tpu.memory_space<vmem>>, %arg2: memref<1x192xf32, #tpu.memory_space<vmem>>, %arg3: memref<1x256xf32, #tpu.memory_space<vmem>>, %arg4: memref<1x192xf32, #tpu.memory_space<vmem>>) attributes {dimension_semantics = [#tpu.dimension_semantics<parallel>], iteration_bounds = array<i64: 1>, scalar_prefetch = 0 : i64, scratch_operands = 0 : i64, tpu.core_type = #tpu.core_type<tc>, window_params = [{pipeline_mode = #tpu.pipeline_mode<synchronous>, transform_indices = @transform_0, window_bounds = array<i64: 256, 192>}, {pipeline_mode = #tpu.pipeline_mode<synchronous>, transform_indices = @transform_1, window_bounds = array<i64: 1, 192>}, {transform_indices = @transform_2, window_bounds = array<i64: 1, 256>}, {transform_indices = @transform_3, window_bounds = array<i64: 1, 192>}]} {
    %c0 = arith.constant 0 : index
    %c0_0 = arith.constant 0 : index
    %0 = vector.load %arg3[%c0, %c0_0] : memref<1x256xf32, #tpu.memory_space<vmem>>, vector<1x256xf32>
    %c0_1 = arith.constant 0 : index
    %c0_2 = arith.constant 0 : index
    %1 = vector.load %arg1[%c0_1, %c0_2] : memref<256x192xf32, #tpu.memory_space<vmem>>, vector<256x192xf32>
    %cst = arith.constant dense<0.000000e+00> : vector<1x192xf32>
    %2 = tpu.matmul %0, %1, %cst {dimension_numbers = #tpu.dot_dimension_numbers<[1], [0], [0], [1], [0, 0, 1, 1], [], []>} : vector<1x256xf32>, vector<256x192xf32>, vector<1x192xf32> -> vector<1x192xf32>
    %c0_3 = arith.constant 0 : index
    %c0_4 = arith.constant 0 : index
    %3 = vector.load %arg2[%c0_3, %c0_4] : memref<1x192xf32, #tpu.memory_space<vmem>>, vector<1x192xf32>
    %4 = arith.addf %2, %3 : vector<1x192xf32>
    %c0_5 = arith.constant 0 : index
    %c0_6 = arith.constant 0 : index
    %5 = vector.load %arg4[%c0_5, %c0_6] : memref<1x192xf32, #tpu.memory_space<vmem>>, vector<1x192xf32>
    tpu.vector_store %arg4[%c0_5, %c0_6], %4 {strides = array<i32>} : memref<1x192xf32, #tpu.memory_space<vmem>>, vector<1x192xf32>,
    return
  }
  func.func @transform_0(%arg0: i32) -> (i32, i32) {
    %c0_i32 = arith.constant 0 : i32
    %c0_i32_0 = arith.constant 0 : i32
    %c0_i32_1 = arith.constant 0 : i32
    return %c0_i32, %c0_i32_0 : i32, i32
  }
  func.func @transform_1(%arg0: i32) -> (i32, i32) {
    %c0_i32 = arith.constant 0 : i32
    %c0_i32_0 = arith.constant 0 : i32
    %c0_i32_1 = arith.constant 0 : i32
    return %c0_i32, %c0_i32_0 : i32, i32
  }
  func.func @transform_2(%arg0: i32) -> (i32, i32) {
    %c0_i32 = arith.constant 0 : i32
    %c0_i32_0 = arith.constant 0 : i32
    return %arg0, %c0_i32 : i32, i32
  }
  func.func @transform_3(%arg0: i32) -> (i32, i32) {
    %c0_i32 = arith.constant 0 : i32
    %c0_i32_0 = arith.constant 0 : i32
    return %arg0, %c0_i32 : i32, i32
  }
}

</mosaic_0001>

<llo_original>
// kernel: tpu_custom_call.1
$region0: #{tpu_custom_call.1}
  #allocation0 [shape = 'u32[]', space=smem, size = 0x4, offset = 0x4, fixed_abs, tag = 'smem constant byte address 0x4 - core index']
  #allocation1 [shape = 'u32[72,128]{1,0:T(1,128)}', space=vmem, size = 0x9000, scoped, tag = 'internal scratch']
  %s0 = inlined_call_operand.vmem [shape: f32[256,192], index: 0, kind: input, shape index: {}]
  %s1 = inlined_call_operand.vmem [shape: f32[1,192], index: 1, kind: input, shape index: {}]
  %s2 = inlined_call_operand.vmem [shape: f32[1,256], index: 2, kind: input, shape index: {}]
  %s3 = inlined_call_operand.hbm [shape: f32[1,192], index: 3, kind: output, shape index: {}]
  %s4 = sld [smem:[#allocation0]]
  $region22: #{tpu_custom_call.1} parent=0
    _
  %s6 = ssub.s32 1, %s4
  %s7 = scalar_select 0, %s6, %s4
  $region1: #{tpu_custom_call.1} parent=0
    #allocation2 [shape = 'u8[1024]{0}', space=vmem, size = 0x400, scoped, tag = 'output window, operand 0, single buffered']
    #allocation3 [shape = 's32[1]{0}', space=sflag, size = 0x4, scoped, tag = 'scoped memory for tpu_custom_call.1']
    %8 = vsyncpa [#allocation3], 0
    // Predicated region
    $region2: #{tpu_custom_call.1} parent=1 // pred_check
      _
    $region3: #{tpu_custom_call.1} parent=1 // pred_check_branch
      %10 = sbr.rel (0) target = $region5
    $region4: #{tpu_custom_call.1} parent=1 // pred_region
      _
    $region5: #{tpu_custom_call.1} parent=1 // pred_fallthru
      _
    // Predicated region
    $region6: #{tpu_custom_call.1} parent=1 // pred_check
      _
    $region7: #{tpu_custom_call.1} parent=1 // pred_check_branch
      %12 = sbr.rel (0) target = $region9
    $region8: #{tpu_custom_call.1} parent=1 // pred_region
      _
    $region9: #{tpu_custom_call.1} parent=1 // pred_fallthru
      _
    // Predicated region
    $region10: #{tpu_custom_call.1} parent=1 // pred_check
      _
    $region11: #{tpu_custom_call.1} parent=1 // pred_check_branch
      %14 = sbr.rel (0) target = $region13
    $region12: #{tpu_custom_call.1} parent=1 // pred_region
      _
    $region13: #{tpu_custom_call.1} parent=1 // pred_fallthru
      _
    %v15 = vld [vmem:[%s2] sm:$0x3]
    %v16 = vld [vmem:[%s0] sm:$0xff]
    %v17 = vld [vmem:[%s0 + $0x8] sm:$0xff]
    %v18 = vld [vmem:[%s0 + $0x10] sm:$0xff]
    %v19 = vld [vmem:[%s0 + $0x18] sm:$0xff]
    %v20 = vld [vmem:[%s0 + $0x20] sm:$0xff]
    %v21 = vld [vmem:[%s0 + $0x28] sm:$0xff]
    %v22 = vld [vmem:[%s0 + $0x30] sm:$0xff]
    %v23 = vld [vmem:[%s0 + $0x38] sm:$0xff]
    %v24 = vld [vmem:[%s0 + $0x40] sm:$0xff]
    %v25 = vld [vmem:[%s0 + $0x48] sm:$0xff]
    %v26 = vld [vmem:[%s0 + $0x50] sm:$0xff]
    %v27 = vld [vmem:[%s0 + $0x58] sm:$0xff]
    %v28 = vld [vmem:[%s0 + $0x60] sm:$0xff]
    %v29 = vld [vmem:[%s0 + $0x68] sm:$0xff]
    %v30 = vld [vmem:[%s0 + $0x70] sm:$0xff]
    %v31 = vld [vmem:[%s0 + $0x78] sm:$0xff]
    %v32 = vld [vmem:[%s0 + $0x80] sm:$0xff]
    %v33 = vld [vmem:[%s0 + $0x88] sm:$0xff]
    %v34 = vld [vmem:[%s0 + $0x90] sm:$0xff]
    %v35 = vld [vmem:[%s0 + $0x98] sm:$0xff]
    %v36 = vld [vmem:[%s0 + $0xa0] sm:$0xff]
    %v37 = vld [vmem:[%s0 + $0xa8] sm:$0xff]
    %v38 = vld [vmem:[%s0 + $0xb0] sm:$0xff]
    %v39 = vld [vmem:[%s0 + $0xb8] sm:$0xff]
    %v40 = vld [vmem:[%s0 + $0xc0] sm:$0xff]
    %v41 = vld [vmem:[%s0 + $0xc8] sm:$0xff]
    %v42 = vld [vmem:[%s0 + $0xd0] sm:$0xff]
    %v43 = vld [vmem:[%s0 + $0xd8] sm:$0xff]
    %v44 = vld [vmem:[%s0 + $0xe0] sm:$0xff]
    %v45 = vld [vmem:[%s0 + $0xe8] sm:$0xff]
    %v46 = vld [vmem:[%s0 + $0xf0] sm:$0xff]
    %v47 = vld [vmem:[%s0 + $0xf8] sm:$0xff]
    %v48 = vld [vmem:[%s0 + $0x100] sm:$0xff]
    %v49 = vld [vmem:[%s0 + $0x108] sm:$0xff]
    %v50 = vld [vmem:[%s0 + $0x110] sm:$0xff]
    %v51 = vld [vmem:[%s0 + $0x118] sm:$0xff]
    %v52 = vld [vmem:[%s0 + $0x120] sm:$0xff]
    %v53 = vld [vmem:[%s0 + $0x128] sm:$0xff]
    %v54 = vld [vmem:[%s0 + $0x130] sm:$0xff]
    %v55 = vld [vmem:[%s0 + $0x138] sm:$0xff]
    %v56 = vld [vmem:[%s0 + $0x140] sm:$0xff]
    %v57 = vld [vmem:[%s0 + $0x148] sm:$0xff]
    %v58 = vld [vmem:[%s0 + $0x150] sm:$0xff]
    %v59 = vld [vmem:[%s0 + $0x158] sm:$0xff]
    %v60 = vld [vmem:[%s0 + $0x160] sm:$0xff]
    %v61 = vld [vmem:[%s0 + $0x168] sm:$0xff]
    %v62 = vld [vmem:[%s0 + $0x170] sm:$0xff]
    %v63 = vld [vmem:[%s0 + $0x178] sm:$0xff]
    %v64 = vld [vmem:[%s0 + $0x180] sm:$0xff]
    %v65 = vld [vmem:[%s0 + $0x188] sm:$0xff]
    %v66 = vld [vmem:[%s0 + $0x190] sm:$0xff]
    %v67 = vld [vmem:[%s0 + $0x198] sm:$0xff]
    %v68 = vld [vmem:[%s0 + $0x1a0] sm:$0xff]
    %v69 = vld [vmem:[%s0 + $0x1a8] sm:$0xff]
    %v70 = vld [vmem:[%s0 + $0x1b0] sm:$0xff]
    %v71 = vld [vmem:[%s0 + $0x1b8] sm:$0xff]
    %v72 = vld [vmem:[%s0 + $0x1c0] sm:$0xff]
    %v73 = vld [vmem:[%s0 + $0x1c8] sm:$0xff]
    %v74 = vld [vmem:[%s0 + $0x1d0] sm:$0xff]
    %v75 = vld [vmem:[%s0 + $0x1d8] sm:$0xff]
    %v76 = vld [vmem:[%s0 + $0x1e0] sm:$0xff]
    %v77 = vld [vmem:[%s0 + $0x1e8] sm:$0xff]
    %v78 = vld [vmem:[%s0 + $0x1f0] sm:$0xff]
    %v79 = vld [vmem:[%s0 + $0x1f8] sm:$0xff]
    %v80 = vld [vmem:[%s1] sm:$0x3]
    %v82 = vperm.slane %v15, 0
    %v83 = vperm.slane %v15, 1
    %v87 = vperm.slane %v80, 0
    %v88 = vperm.slane %v80, 1
    %91 = vmatpush.msra.mxu0 %v46
    %92 = vmatpush.msra.mxu0 %v44
    %93 = vmatpush.msra.mxu0 %v42
    %94 = vmatpush.msra.mxu0 %v40
    %95 = vmatpush.msra.mxu0 %v38
    %96 = vmatpush.msra.mxu0 %v36
    %97 = vmatpush.msra.mxu0 %v34
    %98 = vmatpush.msra.mxu0 %v32
    %99 = vmatpush.msra.mxu0 %v30
    %100 = vmatpush.msra.mxu0 %v28
    %101 = vmatpush.msra.mxu0 %v26
    %102 = vmatpush.msra.mxu0 %v24
    %103 = vmatpush.msra.mxu0 %v22
    %104 = vmatpush.msra.mxu0 %v20
    %105 = vmatpush.msra.mxu0 %v18
    %106 = vmatpush.msra.mxu0 %v16
    %107 = vmatmul.f32.gmra.mxu0 %v82
    %v108 = vpop.f32.mrf.mxu0
    %v109 = vadd.f32 %v87, %v108
    %110 = vdwg.mxu0
    %111 = vmatpush.msra.mxu0 %v78
    %112 = vmatpush.msra.mxu0 %v76
    %113 = vmatpush.msra.mxu0 %v74
    %114 = vmatpush.msra.mxu0 %v72
    %115 = vmatpush.msra.mxu0 %v70
    %116 = vmatpush.msra.mxu0 %v68
    %117 = vmatpush.msra.mxu0 %v66
    %118 = vmatpush.msra.mxu0 %v64
    %119 = vmatpush.msra.mxu0 %v62
    %120 = vmatpush.msra.mxu0 %v60
    %121 = vmatpush.msra.mxu0 %v58
    %122 = vmatpush.msra.mxu0 %v56
    %123 = vmatpush.msra.mxu0 %v54
    %124 = vmatpush.msra.mxu0 %v52
    %125 = vmatpush.msra.mxu0 %v50
    %126 = vmatpush.msra.mxu0 %v48
    %127 = vmatmul.f32.gmra.mxu0 %v83
    %v128 = vpop.f32.mrf.mxu0
    %v129 = vadd.f32 %v109, %v128
    %130 = vdwg.mxu0
    %131 = vmatpush.msra.mxu0 %v47
    %132 = vmatpush.msra.mxu0 %v45
    %133 = vmatpush.msra.mxu0 %v43
    %134 = vmatpush.msra.mxu0 %v41
    %135 = vmatpush.msra.mxu0 %v39
    %136 = vmatpush.msra.mxu0 %v37
    %137 = vmatpush.msra.mxu0 %v35
    %138 = vmatpush.msra.mxu0 %v33
    %139 = vmatpush.msra.mxu0 %v31
    %140 = vmatpush.msra.mxu0 %v29
    %141 = vmatpush.msra.mxu0 %v27
    %142 = vmatpush.msra.mxu0 %v25
    %143 = vmatpush.msra.mxu0 %v23
    %144 = vmatpush.msra.mxu0 %v21
    %145 = vmatpush.msra.mxu0 %v19
    %146 = vmatpush.msra.mxu0 %v17
    %147 = vmatmul.f32.gmra.mxu0 %v82
    %v148 = vpop.f32.mrf.mxu0
    %v149 = vadd.f32 %v88, %v148
    %150 = vdwg.mxu0
    %151 = vmatpush.msra.mxu0 %v79
    %152 = vmatpush.msra.mxu0 %v77
    %153 = vmatpush.msra.mxu0 %v75
    %154 = vmatpush.msra.mxu0 %v73
    %155 = vmatpush.msra.mxu0 %v71
    %156 = vmatpush.msra.mxu0 %v69
    %157 = vmatpush.msra.mxu0 %v67
    %158 = vmatpush.msra.mxu0 %v65
    %159 = vmatpush.msra.mxu0 %v63
    %160 = vmatpush.msra.mxu0 %v61
    %161 = vmatpush.msra.mxu0 %v59
    %162 = vmatpush.msra.mxu0 %v57
    %163 = vmatpush.msra.mxu0 %v55
    %164 = vmatpush.msra.mxu0 %v53
    %165 = vmatpush.msra.mxu0 %v51
    %166 = vmatpush.msra.mxu0 %v49
    %167 = vmatmul.f32.gmra.mxu0 %v83
    %v168 = vpop.f32.mrf.mxu0
    %v169 = vadd.f32 %v149, %v168
    %170 = vdwg.mxu0
    %v173 = vrot.slane %v169, 7
    %vm174 = vcmask 1040384
    %v175 = vsel %vm174, %v129, %v173
    %v177 = vlaneseq
    %vm178 = vcmp.ge.s32.totalorder %v177, 0
    %vm179 = vcmp.lt.s32.totalorder %v177, 192
    %vm180 = vmand %vm178, %vm179
    %181 = vst.msk [vmem:[#allocation2] sm:$0x3] %vm180, %v175
    // Predicated region
    $region14: #{tpu_custom_call.1} parent=1 // pred_check
      _
    $region15: #{tpu_custom_call.1} parent=1 // pred_check_branch
      %183 = sbr.rel (0) target = $region17
    $region16: #{tpu_custom_call.1} parent=1 // pred_region
      %185 = vsyncadd [#allocation3], 0
      %s187 = sshll.u32 [#allocation2], 4
      %s188 = int_to_ptr.vmem [resolvable:$true] %s187
      %s189 = sshll.u32 %s3, 4
      %s190 = int_to_ptr.hbm [resolvable:$true] %s189
      %192 = dma.vmem_to_hbm [thread:$0]  %s188, 32, %s190, [#allocation3]
    $region17: #{tpu_custom_call.1} parent=1 // pred_fallthru
      _
    // Predicated region
    $region18: #{tpu_custom_call.1} parent=1 // pred_check
      _
    $region19: #{tpu_custom_call.1} parent=1 // pred_check_branch
      %194 = sbr.rel (0) target = $region21
    $region20: #{tpu_custom_call.1} parent=1 // pred_region
      %196 = dma.done [#allocation3], 32
    $region21: #{tpu_custom_call.1} parent=1 // pred_fallthru
      _
    %197 = vsyncpa [#allocation3], 1

</llo_original>
